<compile_context>
chip_gen: v6e
topology: v6e:2x2x1
jax: 0.10.0
libtpu: 0.0.40
codegen_flags: <defaults>
</compile_context>

<pallas_src>
import functools

import jax
import jax.numpy as jnp
from jax.experimental import pallas as pl
from jax.experimental.pallas import tpu as pltpu


def _encoder_kernel(x_ref, w0_ref, b0_ref, w1_ref, b1_ref, w2_ref, b2_ref,
                    o_ref):
    """Fused 3-layer MLP: relu(x@W0+b0) -> relu(@W1+b1) -> tanh(@W2+b2).

    Matmuls run on the MXU in the weights' dtype (bf16 by default) with f32
    accumulation; bias-add / ReLU / tanh are computed in f32.
    """
    # Layer 0 + hidden activation (ReLU).  bf16 x bf16 -> f32 accumulate.
    h = jnp.dot(x_ref[...], w0_ref[...], preferred_element_type=jnp.float32)
    h = jnp.maximum(h + b0_ref[...], 0.0)

    # Layer 1 + hidden activation (ReLU).  Cast activations back to the MXU
    # dtype for the dot; accumulate in f32.
    h = jnp.dot(h.astype(w1_ref.dtype), w1_ref[...],
                preferred_element_type=jnp.float32)
    h = jnp.maximum(h + b1_ref[...], 0.0)

    # Final layer + final activation (Tanh).
    h = jnp.dot(h.astype(w2_ref.dtype), w2_ref[...],
                preferred_element_type=jnp.float32)
    o_ref[...] = jnp.tanh(h + b2_ref[...]).astype(o_ref.dtype)


@functools.partial(jax.jit, static_argnames=("group", "block_rows", "min_grid"))
def encoder_forward(x, packed_params, *, group=8, block_rows=16384, min_grid=4):
    """Runs the fused Encoder MLP as a single pallas_call.

    Args:
      x: [B, input_dim] input.  Feed bf16 for bf16 HBM streaming (recommended);
        math is accumulated in f32 either way.  Output dtype follows x.dtype.
      packed_params: (W0,b0,W1,b1,W2,b2); each Wk is the block-diagonal packed
        weight kron(I_group, Wk_orig) of shape (group*in_k, group*out_k)
        (bf16 by default), bk is the tiled f32 bias (1, group*out_k).
        Build with `pack_block_diagonal(init_encoder_params(...), group)`.
      group: batch rows packed into the lane dimension (8 -> 128-lane output).
      block_rows: target number of ORIGINAL batch rows per grid step.
      min_grid: minimum number of grid steps (when the batch is big enough) so
        the "parallel" grid axis can shard across both TensorCores on v7x.
    """
    w0, b0, w1, b1, w2, b2 = packed_params
    B, d_in = x.shape
    gd_in = w0.shape[0]
    gd_out = w2.shape[1]
    assert gd_in == group * d_in, "packed weights inconsistent with `group`"
    d_out = gd_out // group

    # Pad only up to a multiple of `group` (needed for the lane-dense packing
    # reshape).  The last grid block may be partial; Pallas masks its stores.
    B_pad = pl.cdiv(B, group) * group
    if B_pad != B:
        x = jnp.pad(x, ((0, B_pad - B), (0, 0)))

    # Lane-dense packing: each packed row holds `group` consecutive batch rows.
    bp_total = B_pad // group
    xp = x.reshape(bp_total, gd_in)

    # Packed-row tile: large enough that per-step DMA dwarfs the ~0.35us grid
    # step overhead, but keep >= min_grid grid steps when there is enough work
    # (megacore sharding on v7x); tiny batches use one full-extent block.
    bp_target = max(8, ((block_rows // group) // 8) * 8)
    if bp_total >= min_grid * 8:
        bp_cap = max(8, (pl.cdiv(bp_total, min_grid) // 8) * 8)
        block_bp = min(bp_target, bp_cap)
    else:
        block_bp = bp_total
    grid_b = pl.cdiv(bp_total, block_bp)

    def resident_spec(arr):
        # Same block index every grid step -> stays resident in VMEM; no need
        # for a second pipeline buffer.
        return pl.BlockSpec(arr.shape, lambda i: (0,) * arr.ndim,
                            pipeline_mode=pl.Buffered(1))

    out_dtype = x.dtype

    # Advisory cost hint for XLA's scheduler.  Report the TRUE per-row FLOPs
    # (the kron(I_G, W) packing inflates MXU work by `group`x, but that is not
    # useful work).
    d_h0 = w0.shape[1] // group
    d_h1 = w1.shape[1] // group
    flops = 2 * B_pad * (d_in * d_h0 + d_h0 * d_h1 + d_h1 * d_out)
    transcendentals = B_pad * d_out
    weight_bytes = sum(int(a.size) * a.dtype.itemsize for a in packed_params)
    bytes_accessed = (B_pad * d_in * x.dtype.itemsize
                      + B_pad * d_out * x.dtype.itemsize
                      + weight_bytes)

    out_packed = pl.pallas_call(
        _encoder_kernel,
        out_shape=jax.ShapeDtypeStruct((bp_total, gd_out), out_dtype),
        grid_spec=pltpu.PrefetchScalarGridSpec(
            num_scalar_prefetch=0,
            grid=(grid_b,),
            in_specs=[
                pl.BlockSpec((block_bp, gd_in), lambda i: (i, 0)),
                resident_spec(w0), resident_spec(b0),
                resident_spec(w1), resident_spec(b1),
                resident_spec(w2), resident_spec(b2),
            ],
            out_specs=pl.BlockSpec((block_bp, gd_out), lambda i: (i, 0)),
        ),
        compiler_params=pltpu.CompilerParams(
            dimension_semantics=("parallel",),
            vmem_limit_bytes=32 * 1024 * 1024),
        cost_estimate=pl.CostEstimate(
            flops=flops,
            transcendentals=transcendentals,
            bytes_accessed=bytes_accessed),
    )(xp, w0, b0, w1, b1, w2, b2)

    out = out_packed.reshape(B_pad, d_out)
    return out[:B]


def init_encoder_params(key, input_dimension, hidden_dimensions,
                        output_dimension):
    """Deterministic init mimicking nn.Linear's U(-1/sqrt(fan_in), 1/sqrt(fan_in)).

    Returns f32 weights already transposed to (in, out) and biases as (1, out).
    """
    dims = [input_dimension] + list(hidden_dimensions) + [output_dimension]
    params = []
    for k in range(len(dims) - 1):
        fan_in, fan_out = dims[k], dims[k + 1]
        key, wk, bk = jax.random.split(key, 3)
        bound = 1.0 / jnp.sqrt(jnp.float32(fan_in))
        w = jax.random.uniform(wk, (fan_in, fan_out), jnp.float32,
                               minval=-bound, maxval=bound)
        b = jax.random.uniform(bk, (1, fan_out), jnp.float32,
                               minval=-bound, maxval=bound)
        params.extend([w, b])
    return tuple(params)


def pack_block_diagonal(params, group, weight_dtype=jnp.bfloat16):
    """Builds lane-dense block-diagonal weights (kron(I_G, W)) and tiled biases.

    Weights are stored in `weight_dtype` (bf16 by default -> native MXU path);
    biases stay f32 since the bias-add runs on the f32 accumulator.  Done once
    at init; total packed-weight memory is well under 1 MiB for this model.
    """
    packed = []
    for k in range(0, len(params), 2):
        w, b = params[k], params[k + 1]
        eye = jnp.eye(group, dtype=jnp.float32)
        packed.append(jnp.kron(eye, w).astype(weight_dtype))   # (G*in, G*out)
        packed.append(jnp.tile(b, (1, group)).astype(jnp.float32))  # (1, G*out)
    return tuple(packed)


def encoder_reference(x, params):
    """Pure-JAX f32 reference of the PyTorch forward (ReLU hidden, Tanh final)."""
    w0, b0, w1, b1, w2, b2 = params
    h = jnp.maximum(x @ w0 + b0, 0.0)
    h = jnp.maximum(h @ w1 + b1, 0.0)
    return jnp.tanh(h @ w2 + b2)


if __name__ == "__main__":
    # Small, deterministic example consistent with the module's signature.
    # batch=37 is deliberately ragged to exercise the pad-to-group + partial
    # final-block path.
    input_dimension = 32
    hidden_dimensions = [64, 32]
    output_dimension = 16
    batch = 37
    group = 8   # 8*16 = 128-lane output slab (v6e/v7x); consider group=4 on v5e

    key = jax.random.PRNGKey(0)
    key, xkey = jax.random.split(key)
    x_f32 = jax.random.normal(xkey, (batch, input_dimension), jnp.float32)

    params = init_encoder_params(key, input_dimension, hidden_dimensions,
                                 output_dimension)
    packed_params = pack_block_diagonal(params, group,
                                        weight_dtype=jnp.bfloat16)

    # Stream bf16 at the HBM boundary; the kernel accumulates in f32.
    out = encoder_forward(x_f32.astype(jnp.bfloat16), packed_params,
                          group=group)
    out = jax.block_until_ready(out)

    ref = encoder_reference(x_f32, params)
    assert out.shape == (batch, output_dimension)
    # bf16 weights/activations vs. the f32 reference: use a bf16-appropriate
    # tolerance (the old 1e-5 check only applies to a pure-f32 path).
    assert jnp.allclose(out.astype(jnp.float32), ref, atol=5e-2, rtol=5e-2), \
        "mismatch vs reference"

    print("KERNEL_OK")
</pallas_src>

<mosaic_0001>
module attributes {stable_mosaic.version = 11 : i64} {
  func.func @_encoder_kernel(%arg0: i32, %arg1: memref<5x256xbf16, #tpu.memory_space<vmem>>, %arg2: memref<256x512xbf16, #tpu.memory_space<vmem>>, %arg3: memref<1x512xf32, #tpu.memory_space<vmem>>, %arg4: memref<512x256xbf16, #tpu.memory_space<vmem>>, %arg5: memref<1x256xf32, #tpu.memory_space<vmem>>, %arg6: memref<256x128xbf16, #tpu.memory_space<vmem>>, %arg7: memref<1x128xf32, #tpu.memory_space<vmem>>, %arg8: memref<5x128xbf16, #tpu.memory_space<vmem>>) attributes {dimension_semantics = [#tpu.dimension_semantics<parallel>], iteration_bounds = array<i64: 1>, scalar_prefetch = 0 : i64, scratch_operands = 0 : i64, tpu.core_type = #tpu.core_type<tc>, window_params = [{transform_indices = @transform_0, window_bounds = array<i64: 5, 256>}, {pipeline_mode = #tpu.pipeline_mode<synchronous>, transform_indices = @transform_1, window_bounds = array<i64: 256, 512>}, {pipeline_mode = #tpu.pipeline_mode<synchronous>, transform_indices = @transform_2, window_bounds = array<i64: 1, 512>}, {pipeline_mode = #tpu.pipeline_mode<synchronous>, transform_indices = @transform_3, window_bounds = array<i64: 512, 256>}, {pipeline_mode = #tpu.pipeline_mode<synchronous>, transform_indices = @transform_4, window_bounds = array<i64: 1, 256>}, {pipeline_mode = #tpu.pipeline_mode<synchronous>, transform_indices = @transform_5, window_bounds = array<i64: 256, 128>}, {pipeline_mode = #tpu.pipeline_mode<synchronous>, transform_indices = @transform_6, window_bounds = array<i64: 1, 128>}, {transform_indices = @transform_7, window_bounds = array<i64: 5, 128>}]} {
    %c0 = arith.constant 0 : index
    %c0_0 = arith.constant 0 : index
    %0 = vector.load %arg1[%c0, %c0_0] : memref<5x256xbf16, #tpu.memory_space<vmem>>, vector<5x256xbf16>
    %c0_1 = arith.constant 0 : index
    %c0_2 = arith.constant 0 : index
    %1 = vector.load %arg2[%c0_1, %c0_2] : memref<256x512xbf16, #tpu.memory_space<vmem>>, vector<256x512xbf16>
    %cst = arith.constant dense<0.000000e+00> : vector<5x512xf32>
    %2 = tpu.matmul %0, %1, %cst {dimension_numbers = #tpu.dot_dimension_numbers<[1], [0], [0], [1], [0, 0, 1, 1], [], []>} : vector<5x256xbf16>, vector<256x512xbf16>, vector<5x512xf32> -> vector<5x512xf32>
    %c0_3 = arith.constant 0 : index
    %c0_4 = arith.constant 0 : index
    %3 = vector.load %arg3[%c0_3, %c0_4] : memref<1x512xf32, #tpu.memory_space<vmem>>, vector<1x512xf32>
    %4 = vector.broadcast %3 : vector<1x512xf32> to vector<5x512xf32>
    %5 = arith.addf %2, %4 : vector<5x512xf32>
    %cst_5 = arith.constant 0.000000e+00 : f32
    %6 = vector.broadcast %cst_5 : f32 to vector<5x512xf32>
    %7 = arith.maximumf %5, %6 : vector<5x512xf32>
    %8 = arith.truncf %7 : vector<5x512xf32> to vector<5x512xbf16>
    %c0_6 = arith.constant 0 : index
    %c0_7 = arith.constant 0 : index
    %9 = vector.load %arg4[%c0_6, %c0_7] : memref<512x256xbf16, #tpu.memory_space<vmem>>, vector<512x256xbf16>
    %cst_8 = arith.constant dense<0.000000e+00> : vector<5x256xf32>
    %10 = tpu.matmul %8, %9, %cst_8 {dimension_numbers = #tpu.dot_dimension_numbers<[1], [0], [0], [1], [0, 0, 1, 1], [], []>} : vector<5x512xbf16>, vector<512x256xbf16>, vector<5x256xf32> -> vector<5x256xf32>
    %c0_9 = arith.constant 0 : index
    %c0_10 = arith.constant 0 : index
    %11 = vector.load %arg5[%c0_9, %c0_10] : memref<1x256xf32, #tpu.memory_space<vmem>>, vector<1x256xf32>
    %12 = vector.broadcast %11 : vector<1x256xf32> to vector<5x256xf32>
    %13 = arith.addf %10, %12 : vector<5x256xf32>
    %cst_11 = arith.constant 0.000000e+00 : f32
    %14 = vector.broadcast %cst_11 : f32 to vector<5x256xf32>
    %15 = arith.maximumf %13, %14 : vector<5x256xf32>
    %16 = arith.truncf %15 : vector<5x256xf32> to vector<5x256xbf16>
    %c0_12 = arith.constant 0 : index
    %c0_13 = arith.constant 0 : index
    %17 = vector.load %arg6[%c0_12, %c0_13] : memref<256x128xbf16, #tpu.memory_space<vmem>>, vector<256x128xbf16>
    %cst_14 = arith.constant dense<0.000000e+00> : vector<5x128xf32>
    %18 = tpu.matmul %16, %17, %cst_14 {dimension_numbers = #tpu.dot_dimension_numbers<[1], [0], [0], [1], [0, 0, 1, 1], [], []>} : vector<5x256xbf16>, vector<256x128xbf16>, vector<5x128xf32> -> vector<5x128xf32>
    %c0_15 = arith.constant 0 : index
    %c0_16 = arith.constant 0 : index
    %19 = vector.load %arg7[%c0_15, %c0_16] : memref<1x128xf32, #tpu.memory_space<vmem>>, vector<1x128xf32>
    %20 = vector.broadcast %19 : vector<1x128xf32> to vector<5x128xf32>
    %21 = arith.addf %18, %20 : vector<5x128xf32>
    %22 = math.tanh %21 : vector<5x128xf32>
    %23 = arith.truncf %22 : vector<5x128xf32> to vector<5x128xbf16>
    %c0_17 = arith.constant 0 : index
    %c0_18 = arith.constant 0 : index
    %24 = vector.load %arg8[%c0_17, %c0_18] : memref<5x128xbf16, #tpu.memory_space<vmem>>, vector<5x128xbf16>
    tpu.vector_store %arg8[%c0_17, %c0_18], %23 {strides = array<i32>} : memref<5x128xbf16, #tpu.memory_space<vmem>>, vector<5x128xbf16>,
    return
  }
  func.func @transform_0(%arg0: i32) -> (i32, i32) {
    %c0_i32 = arith.constant 0 : i32
    %c0_i32_0 = arith.constant 0 : i32
    return %arg0, %c0_i32 : i32, i32
  }
  func.func @transform_1(%arg0: i32) -> (i32, i32) {
    %c0_i32 = arith.constant 0 : i32
    %c0_i32_0 = arith.constant 0 : i32
    %c0_i32_1 = arith.constant 0 : i32
    return %c0_i32, %c0_i32_0 : i32, i32
  }
  func.func @transform_2(%arg0: i32) -> (i32, i32) {
    %c0_i32 = arith.constant 0 : i32
    %c0_i32_0 = arith.constant 0 : i32
    %c0_i32_1 = arith.constant 0 : i32
    return %c0_i32, %c0_i32_0 : i32, i32
  }
  func.func @transform_3(%arg0: i32) -> (i32, i32) {
    %c0_i32 = arith.constant 0 : i32
    %c0_i32_0 = arith.constant 0 : i32
    %c0_i32_1 = arith.constant 0 : i32
    return %c0_i32, %c0_i32_0 : i32, i32
  }
  func.func @transform_4(%arg0: i32) -> (i32, i32) {
    %c0_i32 = arith.constant 0 : i32
    %c0_i32_0 = arith.constant 0 : i32
    %c0_i32_1 = arith.constant 0 : i32
    return %c0_i32, %c0_i32_0 : i32, i32
  }
  func.func @transform_5(%arg0: i32) -> (i32, i32) {
    %c0_i32 = arith.constant 0 : i32
    %c0_i32_0 = arith.constant 0 : i32
    %c0_i32_1 = arith.constant 0 : i32
    return %c0_i32, %c0_i32_0 : i32, i32
  }
  func.func @transform_6(%arg0: i32) -> (i32, i32) {
    %c0_i32 = arith.constant 0 : i32
    %c0_i32_0 = arith.constant 0 : i32
    %c0_i32_1 = arith.constant 0 : i32
    return %c0_i32, %c0_i32_0 : i32, i32
  }
  func.func @transform_7(%arg0: i32) -> (i32, i32) {
    %c0_i32 = arith.constant 0 : i32
    %c0_i32_0 = arith.constant 0 : i32
    return %arg0, %c0_i32 : i32, i32
  }
}

</mosaic_0001>

<llo_original>
// kernel: encoder_forward.1
$region0: #{encoder_forward.1}
  #allocation0 [shape = 'u32[]', space=smem, size = 0x4, offset = 0x4, fixed_abs, tag = 'smem constant byte address 0x4 - core index']
  #allocation1 [shape = 'u32[144,128]{1,0:T(1,128)}', space=vmem, size = 0x12000, scoped, tag = 'internal scratch']
  %s0 = inlined_call_operand.vmem [shape: bf16[5,256], index: 0, kind: input, shape index: {}]
  %s1 = inlined_call_operand.hbm [shape: bf16[256,512], index: 1, kind: input, shape index: {}]
  %s2 = inlined_call_operand.vmem [shape: f32[1,512], index: 2, kind: input, shape index: {}]
  %s3 = inlined_call_operand.hbm [shape: bf16[512,256], index: 3, kind: input, shape index: {}]
  %s4 = inlined_call_operand.vmem [shape: f32[1,256], index: 4, kind: input, shape index: {}]
  %s5 = inlined_call_operand.hbm [shape: bf16[256,128], index: 5, kind: input, shape index: {}]
  %s6 = inlined_call_operand.vmem [shape: f32[1,128], index: 6, kind: input, shape index: {}]
  %s7 = inlined_call_operand.vmem [shape: bf16[5,128], index: 7, kind: output, shape index: {}]
  %s8 = sld [smem:[#allocation0]]
  $region50: #{encoder_forward.1} parent=0
    _
  %s10 = ssub.s32 1, %s8
  %s11 = scalar_select 0, %s10, %s8
  $region1: #{encoder_forward.1} parent=0
    #allocation2 [shape = 'u8[262144]{0}', space=vmem, size = 0x40000, scoped, tag = 'input window, operand 1, single buffered']
    #allocation3 [shape = 's32[1]{0}', space=sflag, size = 0x4, scoped, tag = 'scoped memory for encoder_forward.1']
    #allocation4 [shape = 'u8[262144]{0}', space=vmem, size = 0x40000, scoped, tag = 'input window, operand 3, single buffered']
    #allocation5 [shape = 's32[1]{0}', space=sflag, size = 0x4, scoped, tag = 'scoped memory for encoder_forward.1']
    #allocation6 [shape = 'u8[65536]{0}', space=vmem, size = 0x10000, scoped, tag = 'input window, operand 5, single buffered']
    %12 = vsyncpa [#allocation3], 0
    %13 = vsyncpa [#allocation5], 0
    // Predicated region
    $region2: #{encoder_forward.1} parent=1 // pred_check
      _
    $region3: #{encoder_forward.1} parent=1 // pred_check_branch
      %15 = sbr.rel (0) target = $region5
    $region4: #{encoder_forward.1} parent=1 // pred_region
      _
    $region5: #{encoder_forward.1} parent=1 // pred_fallthru
      _
    // Predicated region
    $region6: #{encoder_forward.1} parent=1 // pred_check
      _
    $region7: #{encoder_forward.1} parent=1 // pred_check_branch
      %17 = sbr.rel (0) target = $region9
    $region8: #{encoder_forward.1} parent=1 // pred_region
      %s19 = ssub.s32 8192, 8192
      %20 = vsyncadd [#allocation3], %s19
      %s21 = sshll.u32 [#allocation2], 4
      %s22 = int_to_ptr.vmem [resolvable:$true] %s21
      %27 = dma.hbm_to_vmem [thread:$0]  %s1, 8192, %s22, [#allocation3], 256, 256, 16
    $region9: #{encoder_forward.1} parent=1 // pred_fallthru
      _
    // Predicated region
    $region10: #{encoder_forward.1} parent=1 // pred_check
      _
    $region11: #{encoder_forward.1} parent=1 // pred_check_branch
      %29 = sbr.rel (0) target = $region13
    $region12: #{encoder_forward.1} parent=1 // pred_region
      _
    $region13: #{encoder_forward.1} parent=1 // pred_fallthru
      _
    // Predicated region
    $region14: #{encoder_forward.1} parent=1 // pred_check
      _
    $region15: #{encoder_forward.1} parent=1 // pred_check_branch
      %31 = sbr.rel (0) target = $region17
    $region16: #{encoder_forward.1} parent=1 // pred_region
      %s33 = ssub.s32 8192, 8192
      %34 = vsyncadd [#allocation5], %s33
      %s35 = sshll.u32 [#allocation4], 4
      %s36 = int_to_ptr.vmem [resolvable:$true] %s35
      %41 = dma.hbm_to_vmem [thread:$0]  %s3, 8192, %s36, [#allocation5], 128, 128, 8
    $region17: #{encoder_forward.1} parent=1 // pred_fallthru
      _
    // Predicated region
    $region18: #{encoder_forward.1} parent=1 // pred_check
      _
    $region19: #{encoder_forward.1} parent=1 // pred_check_branch
      %43 = sbr.rel (0) target = $region21
    $region20: #{encoder_forward.1} parent=1 // pred_region
      _
    $region21: #{encoder_forward.1} parent=1 // pred_fallthru
      _
    // Predicated region
    $region22: #{encoder_forward.1} parent=1 // pred_check
      _
    $region23: #{encoder_forward.1} parent=1 // pred_check_branch
      %45 = sbr.rel (0) target = $region25
    $region24: #{encoder_forward.1} parent=1 // pred_region
      %s47 = ssub.s32 2048, 2048
      %48 = vsyncadd [#allocation5], %s47
      %s49 = sshll.u32 [#allocation6], 4
      %s50 = int_to_ptr.vmem [resolvable:$true] %s49
      %55 = dma.hbm_to_vmem [thread:$0]  %s5, 2048, %s50, [#allocation5], 64, 64, 4
    $region25: #{encoder_forward.1} parent=1 // pred_fallthru
      _
    // Predicated region
    $region26: #{encoder_forward.1} parent=1 // pred_check
      _
    $region27: #{encoder_forward.1} parent=1 // pred_check_branch
      %57 = sbr.rel (0) target = $region29
    $region28: #{encoder_forward.1} parent=1 // pred_region
      _
    $region29: #{encoder_forward.1} parent=1 // pred_fallthru
      _
    // Predicated region
    $region30: #{encoder_forward.1} parent=1 // pred_check
      _
    $region31: #{encoder_forward.1} parent=1 // pred_check_branch
      %59 = sbr.rel (0) target = $region33
    $region32: #{encoder_forward.1} parent=1 // pred_region
      %60 = dma.done [#allocation3], 8192
    $region33: #{encoder_forward.1} parent=1 // pred_fallthru
      _
    // Predicated region
    $region34: #{encoder_forward.1} parent=1 // pred_check
      _
    $region35: #{encoder_forward.1} parent=1 // pred_check_branch
      %62 = sbr.rel (0) target = $region37
    $region36: #{encoder_forward.1} parent=1 // pred_region
      %63 = dma.done [#allocation5], 8192
    $region37: #{encoder_forward.1} parent=1 // pred_fallthru
      _
    // Predicated region
    $region38: #{encoder_forward.1} parent=1 // pred_check
      _
    $region39: #{encoder_forward.1} parent=1 // pred_check_branch
      %65 = sbr.rel (0) target = $region41
    $region40: #{encoder_forward.1} parent=1 // pred_region
      %66 = dma.done [#allocation5], 2048
    $region41: #{encoder_forward.1} parent=1 // pred_fallthru
      _
    %v68 = vld [vmem:[%s0] sm:$0x77]
    %v69 = vld [vmem:[#allocation2] sm:$0xff]
    %v70 = vld [vmem:[#allocation2 + $0x8] sm:$0xff]
    %v71 = vld [vmem:[#allocation2 + $0x10] sm:$0xff]
    %v72 = vld [vmem:[#allocation2 + $0x18] sm:$0xff]
    %v73 = vld [vmem:[#allocation2 + $0x20] sm:$0xff]
    %v74 = vld [vmem:[#allocation2 + $0x28] sm:$0xff]
    %v75 = vld [vmem:[#allocation2 + $0x30] sm:$0xff]
    %v76 = vld [vmem:[#allocation2 + $0x38] sm:$0xff]
    %v77 = vld [vmem:[#allocation2 + $0x40] sm:$0xff]
    %v78 = vld [vmem:[#allocation2 + $0x48] sm:$0xff]
    %v79 = vld [vmem:[#allocation2 + $0x50] sm:$0xff]
    %v80 = vld [vmem:[#allocation2 + $0x58] sm:$0xff]
    %v81 = vld [vmem:[#allocation2 + $0x60] sm:$0xff]
    %v82 = vld [vmem:[#allocation2 + $0x68] sm:$0xff]
    %v83 = vld [vmem:[#allocation2 + $0x70] sm:$0xff]
    %v84 = vld [vmem:[#allocation2 + $0x78] sm:$0xff]
    %v85 = vld [vmem:[#allocation2 + $0x80] sm:$0xff]
    %v86 = vld [vmem:[#allocation2 + $0x88] sm:$0xff]
    %v87 = vld [vmem:[#allocation2 + $0x90] sm:$0xff]
    %v88 = vld [vmem:[#allocation2 + $0x98] sm:$0xff]
    %v89 = vld [vmem:[#allocation2 + $0xa0] sm:$0xff]
    %v90 = vld [vmem:[#allocation2 + $0xa8] sm:$0xff]
    %v91 = vld [vmem:[#allocation2 + $0xb0] sm:$0xff]
    %v92 = vld [vmem:[#allocation2 + $0xb8] sm:$0xff]
    %v93 = vld [vmem:[#allocation2 + $0xc0] sm:$0xff]
    %v94 = vld [vmem:[#allocation2 + $0xc8] sm:$0xff]
    %v95 = vld [vmem:[#allocation2 + $0xd0] sm:$0xff]
    %v96 = vld [vmem:[#allocation2 + $0xd8] sm:$0xff]
    %v97 = vld [vmem:[#allocation2 + $0xe0] sm:$0xff]
    %v98 = vld [vmem:[#allocation2 + $0xe8] sm:$0xff]
    %v99 = vld [vmem:[#allocation2 + $0xf0] sm:$0xff]
    %v100 = vld [vmem:[#allocation2 + $0xf8] sm:$0xff]
    %v101 = vld [vmem:[#allocation2 + $0x100] sm:$0xff]
    %v102 = vld [vmem:[#allocation2 + $0x108] sm:$0xff]
    %v103 = vld [vmem:[#allocation2 + $0x110] sm:$0xff]
    %v104 = vld [vmem:[#allocation2 + $0x118] sm:$0xff]
    %v105 = vld [vmem:[#allocation2 + $0x120] sm:$0xff]
    %v106 = vld [vmem:[#allocation2 + $0x128] sm:$0xff]
    %v107 = vld [vmem:[#allocation2 + $0x130] sm:$0xff]
    %v108 = vld [vmem:[#allocation2 + $0x138] sm:$0xff]
    %v109 = vld [vmem:[#allocation2 + $0x140] sm:$0xff]
    %v110 = vld [vmem:[#allocation2 + $0x148] sm:$0xff]
    %v111 = vld [vmem:[#allocation2 + $0x150] sm:$0xff]
    %v112 = vld [vmem:[#allocation2 + $0x158] sm:$0xff]
    %v113 = vld [vmem:[#allocation2 + $0x160] sm:$0xff]
    %v114 = vld [vmem:[#allocation2 + $0x168] sm:$0xff]
    %v115 = vld [vmem:[#allocation2 + $0x170] sm:$0xff]
    %v116 = vld [vmem:[#allocation2 + $0x178] sm:$0xff]
    %v117 = vld [vmem:[#allocation2 + $0x180] sm:$0xff]
    %v118 = vld [vmem:[#allocation2 + $0x188] sm:$0xff]
    %v119 = vld [vmem:[#allocation2 + $0x190] sm:$0xff]
    %v120 = vld [vmem:[#allocation2 + $0x198] sm:$0xff]
    %v121 = vld [vmem:[#allocation2 + $0x1a0] sm:$0xff]
    %v122 = vld [vmem:[#allocation2 + $0x1a8] sm:$0xff]
    %v123 = vld [vmem:[#allocation2 + $0x1b0] sm:$0xff]
    %v124 = vld [vmem:[#allocation2 + $0x1b8] sm:$0xff]
    %v125 = vld [vmem:[#allocation2 + $0x1c0] sm:$0xff]
    %v126 = vld [vmem:[#allocation2 + $0x1c8] sm:$0xff]
    %v127 = vld [vmem:[#allocation2 + $0x1d0] sm:$0xff]
    %v128 = vld [vmem:[#allocation2 + $0x1d8] sm:$0xff]
    %v129 = vld [vmem:[#allocation2 + $0x1e0] sm:$0xff]
    %v130 = vld [vmem:[#allocation2 + $0x1e8] sm:$0xff]
    %v131 = vld [vmem:[#allocation2 + $0x1f0] sm:$0xff]
    %v132 = vld [vmem:[#allocation2 + $0x1f8] sm:$0xff]
    %v133 = vld [vmem:[%s2] sm:$0xf]
    %v135 = vlaneseq
    %v136 = vshrl.u32 %v135, 7
    %v137 = vsub.s32 0, %v136
    %v138 = vrot.slane %v133, %v137
    %v139 = vlaneseq
    %v140 = vshrl.u32 %v139, 7
    %v141 = vsub.s32 1, %v140
    %v142 = vrot.slane %v133, %v141
    %v143 = vlaneseq
    %v144 = vshrl.u32 %v143, 7
    %v145 = vsub.s32 2, %v144
    %v146 = vrot.slane %v133, %v145
    %v147 = vlaneseq
    %v148 = vshrl.u32 %v147, 7
    %v149 = vsub.s32 3, %v148
    %v150 = vrot.slane %v133, %v149
    %v156 = vunpack.c.l.b16 %v68
    %v157 = vunpack.c.h.b16 %v68
    %v158 = vpack.c.b16 %v156, %v156
    %v159 = vpack.c.b16 %v157, %v157
    %v226 = vunpack.c.l.b16 %v69
    %v227 = vunpack.c.h.b16 %v69
    %v228 = vunpack.c.l.b16 %v70
    %v229 = vunpack.c.h.b16 %v70
    %v230 = vunpack.c.l.b16 %v71
    %v231 = vunpack.c.h.b16 %v71
    %v232 = vunpack.c.l.b16 %v72
    %v233 = vunpack.c.h.b16 %v72
    %v234 = vunpack.c.l.b16 %v73
    %v235 = vunpack.c.h.b16 %v73
    %v236 = vunpack.c.l.b16 %v74
    %v237 = vunpack.c.h.b16 %v74
    %v238 = vunpack.c.l.b16 %v75
    %v239 = vunpack.c.h.b16 %v75
    %v240 = vunpack.c.l.b16 %v76
    %v241 = vunpack.c.h.b16 %v76
    %v242 = vunpack.c.l.b16 %v77
    %v243 = vunpack.c.h.b16 %v77
    %v244 = vunpack.c.l.b16 %v78
    %v245 = vunpack.c.h.b16 %v78
    %v246 = vunpack.c.l.b16 %v79
    %v247 = vunpack.c.h.b16 %v79
    %v248 = vunpack.c.l.b16 %v80
    %v249 = vunpack.c.h.b16 %v80
    %v250 = vunpack.c.l.b16 %v81
    %v251 = vunpack.c.h.b16 %v81
    %v252 = vunpack.c.l.b16 %v82
    %v253 = vunpack.c.h.b16 %v82
    %v254 = vunpack.c.l.b16 %v83
    %v255 = vunpack.c.h.b16 %v83
    %v256 = vunpack.c.l.b16 %v84
    %v257 = vunpack.c.h.b16 %v84
    %v258 = vunpack.c.l.b16 %v85
    %v259 = vunpack.c.h.b16 %v85
    %v260 = vunpack.c.l.b16 %v86
    %v261 = vunpack.c.h.b16 %v86
    %v262 = vunpack.c.l.b16 %v87
    %v263 = vunpack.c.h.b16 %v87
    %v264 = vunpack.c.l.b16 %v88
    %v265 = vunpack.c.h.b16 %v88
    %v266 = vunpack.c.l.b16 %v89
    %v267 = vunpack.c.h.b16 %v89
    %v268 = vunpack.c.l.b16 %v90
    %v269 = vunpack.c.h.b16 %v90
    %v270 = vunpack.c.l.b16 %v91
    %v271 = vunpack.c.h.b16 %v91
    %v272 = vunpack.c.l.b16 %v92
    %v273 = vunpack.c.h.b16 %v92
    %v274 = vunpack.c.l.b16 %v93
    %v275 = vunpack.c.h.b16 %v93
    %v276 = vunpack.c.l.b16 %v94
    %v277 = vunpack.c.h.b16 %v94
    %v278 = vunpack.c.l.b16 %v95
    %v279 = vunpack.c.h.b16 %v95
    %v280 = vunpack.c.l.b16 %v96
    %v281 = vunpack.c.h.b16 %v96
    %v282 = vunpack.c.l.b16 %v97
    %v283 = vunpack.c.h.b16 %v97
    %v284 = vunpack.c.l.b16 %v98
    %v285 = vunpack.c.h.b16 %v98
    %v286 = vunpack.c.l.b16 %v99
    %v287 = vunpack.c.h.b16 %v99
    %v288 = vunpack.c.l.b16 %v100
    %v289 = vunpack.c.h.b16 %v100
    %v290 = vunpack.c.l.b16 %v101
    %v291 = vunpack.c.h.b16 %v101
    %v292 = vunpack.c.l.b16 %v102
    %v293 = vunpack.c.h.b16 %v102
    %v294 = vunpack.c.l.b16 %v103
    %v295 = vunpack.c.h.b16 %v103
    %v296 = vunpack.c.l.b16 %v104
    %v297 = vunpack.c.h.b16 %v104
    %v298 = vunpack.c.l.b16 %v105
    %v299 = vunpack.c.h.b16 %v105
    %v300 = vunpack.c.l.b16 %v106
    %v301 = vunpack.c.h.b16 %v106
    %v302 = vunpack.c.l.b16 %v107
    %v303 = vunpack.c.h.b16 %v107
    %v304 = vunpack.c.l.b16 %v108
    %v305 = vunpack.c.h.b16 %v108
    %v306 = vunpack.c.l.b16 %v109
    %v307 = vunpack.c.h.b16 %v109
    %v308 = vunpack.c.l.b16 %v110
    %v309 = vunpack.c.h.b16 %v110
    %v310 = vunpack.c.l.b16 %v111
    %v311 = vunpack.c.h.b16 %v111
    %v312 = vunpack.c.l.b16 %v112
    %v313 = vunpack.c.h.b16 %v112
    %v314 = vunpack.c.l.b16 %v113
    %v315 = vunpack.c.h.b16 %v113
    %v316 = vunpack.c.l.b16 %v114
    %v317 = vunpack.c.h.b16 %v114
    %v318 = vunpack.c.l.b16 %v115
    %v319 = vunpack.c.h.b16 %v115
    %v320 = vunpack.c.l.b16 %v116
    %v321 = vunpack.c.h.b16 %v116
    %v322 = vunpack.c.l.b16 %v117
    %v323 = vunpack.c.h.b16 %v117
    %v324 = vunpack.c.l.b16 %v118
    %v325 = vunpack.c.h.b16 %v118
    %v326 = vunpack.c.l.b16 %v119
    %v327 = vunpack.c.h.b16 %v119
    %v328 = vunpack.c.l.b16 %v120
    %v329 = vunpack.c.h.b16 %v120
    %v330 = vunpack.c.l.b16 %v121
    %v331 = vunpack.c.h.b16 %v121
    %v332 = vunpack.c.l.b16 %v122
    %v333 = vunpack.c.h.b16 %v122
    %v334 = vunpack.c.l.b16 %v123
    %v335 = vunpack.c.h.b16 %v123
    %v336 = vunpack.c.l.b16 %v124
    %v337 = vunpack.c.h.b16 %v124
    %v338 = vunpack.c.l.b16 %v125
    %v339 = vunpack.c.h.b16 %v125
    %v340 = vunpack.c.l.b16 %v126
    %v341 = vunpack.c.h.b16 %v126
    %v342 = vunpack.c.l.b16 %v127
    %v343 = vunpack.c.h.b16 %v127
    %v344 = vunpack.c.l.b16 %v128
    %v345 = vunpack.c.h.b16 %v128
    %v346 = vunpack.c.l.b16 %v129
    %v347 = vunpack.c.h.b16 %v129
    %v348 = vunpack.c.l.b16 %v130
    %v349 = vunpack.c.h.b16 %v130
    %v350 = vunpack.c.l.b16 %v131
    %v351 = vunpack.c.h.b16 %v131
    %v352 = vunpack.c.l.b16 %v132
    %v353 = vunpack.c.h.b16 %v132
    %v354 = vpack.c.b16 %v230, %v226
    %v355 = vpack.c.b16 %v231, %v227
    %v356 = vpack.c.b16 %v232, %v228
    %v357 = vpack.c.b16 %v233, %v229
    %v358 = vpack.c.b16 %v238, %v234
    %v359 = vpack.c.b16 %v239, %v235
    %v360 = vpack.c.b16 %v240, %v236
    %v361 = vpack.c.b16 %v241, %v237
    %v362 = vpack.c.b16 %v246, %v242
    %v363 = vpack.c.b16 %v247, %v243
    %v364 = vpack.c.b16 %v248, %v244
    %v365 = vpack.c.b16 %v249, %v245
    %v366 = vpack.c.b16 %v254, %v250
    %v367 = vpack.c.b16 %v255, %v251
    %v368 = vpack.c.b16 %v256, %v252
    %v369 = vpack.c.b16 %v257, %v253
    %v370 = vpack.c.b16 %v262, %v258
    %v371 = vpack.c.b16 %v263, %v259
    %v372 = vpack.c.b16 %v264, %v260
    %v373 = vpack.c.b16 %v265, %v261
    %v374 = vpack.c.b16 %v270, %v266
    %v375 = vpack.c.b16 %v271, %v267
    %v376 = vpack.c.b16 %v272, %v268
    %v377 = vpack.c.b16 %v273, %v269
    %v378 = vpack.c.b16 %v278, %v274
    %v379 = vpack.c.b16 %v279, %v275
    %v380 = vpack.c.b16 %v280, %v276
    %v381 = vpack.c.b16 %v281, %v277
    %v382 = vpack.c.b16 %v286, %v282
    %v383 = vpack.c.b16 %v287, %v283
    %v384 = vpack.c.b16 %v288, %v284
    %v385 = vpack.c.b16 %v289, %v285
    %v386 = vpack.c.b16 %v294, %v290
    %v387 = vpack.c.b16 %v295, %v291
    %v388 = vpack.c.b16 %v296, %v292
    %v389 = vpack.c.b16 %v297, %v293
    %v390 = vpack.c.b16 %v302, %v298
    %v391 = vpack.c.b16 %v303, %v299
    %v392 = vpack.c.b16 %v304, %v300
    %v393 = vpack.c.b16 %v305, %v301
    %v394 = vpack.c.b16 %v310, %v306
    %v395 = vpack.c.b16 %v311, %v307
    %v396 = vpack.c.b16 %v312, %v308
    %v397 = vpack.c.b16 %v313, %v309
    %v398 = vpack.c.b16 %v318, %v314
    %v399 = vpack.c.b16 %v319, %v315
    %v400 = vpack.c.b16 %v320, %v316
    %v401 = vpack.c.b16 %v321, %v317
    %v402 = vpack.c.b16 %v326, %v322
    %v403 = vpack.c.b16 %v327, %v323
    %v404 = vpack.c.b16 %v328, %v324
    %v405 = vpack.c.b16 %v329, %v325
    %v406 = vpack.c.b16 %v334, %v330
    %v407 = vpack.c.b16 %v335, %v331
    %v408 = vpack.c.b16 %v336, %v332
    %v409 = vpack.c.b16 %v337, %v333
    %v410 = vpack.c.b16 %v342, %v338
    %v411 = vpack.c.b16 %v343, %v339
    %v412 = vpack.c.b16 %v344, %v340
    %v413 = vpack.c.b16 %v345, %v341
    %v414 = vpack.c.b16 %v350, %v346
    %v415 = vpack.c.b16 %v351, %v347
    %v416 = vpack.c.b16 %v352, %v348
    %v417 = vpack.c.b16 %v353, %v349
    %482 = vmatprep.subr.bf16.mxu0 %v383
    %483 = vmatpush1.bf16.msra.mxu0 %v382
    %484 = vmatprep.subr.bf16.mxu0 %v379
    %485 = vmatpush1.bf16.msra.mxu0 %v378
    %486 = vmatprep.subr.bf16.mxu0 %v375
    %487 = vmatpush1.bf16.msra.mxu0 %v374
    %488 = vmatprep.subr.bf16.mxu0 %v371
    %489 = vmatpush1.bf16.msra.mxu0 %v370
    %490 = vmatprep.subr.bf16.mxu0 %v367
    %491 = vmatpush1.bf16.msra.mxu0 %v366
    %492 = vmatprep.subr.bf16.mxu0 %v363
    %493 = vmatpush1.bf16.msra.mxu0 %v362
    %494 = vmatprep.subr.bf16.mxu0 %v359
    %495 = vmatpush1.bf16.msra.mxu0 %v358
    %496 = vmatprep.subr.bf16.mxu0 %v355
    %497 = vmatpush1.bf16.msra.mxu0 %v354
    %498 = vmatprep.subr.bf16.mxu0 %v415
    %499 = vmatpush2.bf16.msra.mxu0 %v414
    %500 = vmatprep.subr.bf16.mxu0 %v411
    %501 = vmatpush2.bf16.msra.mxu0 %v410
    %502 = vmatprep.subr.bf16.mxu0 %v407
    %503 = vmatpush2.bf16.msra.mxu0 %v406
    %504 = vmatprep.subr.bf16.mxu0 %v403
    %505 = vmatpush2.bf16.msra.mxu0 %v402
    %506 = vmatprep.subr.bf16.mxu0 %v399
    %507 = vmatpush2.bf16.msra.mxu0 %v398
    %508 = vmatprep.subr.bf16.mxu0 %v395
    %509 = vmatpush2.bf16.msra.mxu0 %v394
    %510 = vmatprep.subr.bf16.mxu0 %v391
    %511 = vmatpush2.bf16.msra.mxu0 %v390
    %512 = vmatprep.subr.bf16.mxu0 %v387
    %513 = vmatpush2.bf16.msra.mxu0 %v386
    %514 = vmatprep.mubr.bf16.mxu0 %v159
    %515 = vmatmul.mubr.bf16.gmra.mxu0 %v158
    %v516 = vpop.f32.mrf.mxu0
    %v517 = vadd.f32 %v138, %v516
    %v518 = vpop.f32.mrf.mxu0
    %v519 = vadd.f32 %v142, %v518
    %v520 = vpop.f32.mrf.mxu0
    %v521 = vpop.f32.mrf.mxu0
    %522 = vdwg.mxu0
    %523 = vmatprep.subr.bf16.mxu0 %v385
    %524 = vmatpush1.bf16.msra.mxu0 %v384
    %525 = vmatprep.subr.bf16.mxu0 %v381
    %526 = vmatpush1.bf16.msra.mxu0 %v380
    %527 = vmatprep.subr.bf16.mxu0 %v377
    %528 = vmatpush1.bf16.msra.mxu0 %v376
    %529 = vmatprep.subr.bf16.mxu0 %v373
    %530 = vmatpush1.bf16.msra.mxu0 %v372
    %531 = vmatprep.subr.bf16.mxu0 %v369
    %532 = vmatpush1.bf16.msra.mxu0 %v368
    %533 = vmatprep.subr.bf16.mxu0 %v365
    %534 = vmatpush1.bf16.msra.mxu0 %v364
    %535 = vmatprep.subr.bf16.mxu0 %v361
    %536 = vmatpush1.bf16.msra.mxu0 %v360
    %537 = vmatprep.subr.bf16.mxu0 %v357
    %538 = vmatpush1.bf16.msra.mxu0 %v356
    %539 = vmatprep.subr.bf16.mxu0 %v417
    %540 = vmatpush2.bf16.msra.mxu0 %v416
    %541 = vmatprep.subr.bf16.mxu0 %v413
    %542 = vmatpush2.bf16.msra.mxu0 %v412
    %543 = vmatprep.subr.bf16.mxu0 %v409
    %544 = vmatpush2.bf16.msra.mxu0 %v408
    %545 = vmatprep.subr.bf16.mxu0 %v405
    %546 = vmatpush2.bf16.msra.mxu0 %v404
    %547 = vmatprep.subr.bf16.mxu0 %v401
    %548 = vmatpush2.bf16.msra.mxu0 %v400
    %549 = vmatprep.subr.bf16.mxu0 %v397
    %550 = vmatpush2.bf16.msra.mxu0 %v396
    %551 = vmatprep.subr.bf16.mxu0 %v393
    %552 = vmatpush2.bf16.msra.mxu0 %v392
    %553 = vmatprep.subr.bf16.mxu0 %v389
    %554 = vmatpush2.bf16.msra.mxu0 %v388
    %555 = vmatprep.mubr.bf16.mxu0 %v159
    %556 = vmatmul.mubr.bf16.gmra.mxu0 %v158
    %v557 = vpop.f32.mrf.mxu0
    %v558 = vadd.f32 %v146, %v557
    %v559 = vpop.f32.mrf.mxu0
    %v560 = vadd.f32 %v150, %v559
    %v561 = vpop.f32.mrf.mxu0
    %v562 = vpop.f32.mrf.mxu0
    %563 = vdwg.mxu0
    %v564 = vmax.f32 %v517, 0.0
    %v565 = vmax.f32 %v519, 0.0
    %v566 = vmax.f32 %v558, 0.0
    %v567 = vmax.f32 %v560, 0.0
    %v568 = vpack.c.bf16 %v564, %v564
    %v569 = vpack.c.bf16 %v565, %v565
    %v570 = vpack.c.bf16 %v566, %v566
    %v571 = vpack.c.bf16 %v567, %v567
    %v572 = vld [vmem:[#allocation4] sm:$0xff]
    %v573 = vld [vmem:[#allocation4 + $0x8] sm:$0xff]
    %v574 = vld [vmem:[#allocation4 + $0x10] sm:$0xff]
    %v575 = vld [vmem:[#allocation4 + $0x18] sm:$0xff]
    %v576 = vld [vmem:[#allocation4 + $0x20] sm:$0xff]
    %v577 = vld [vmem:[#allocation4 + $0x28] sm:$0xff]
    %v578 = vld [vmem:[#allocation4 + $0x30] sm:$0xff]
    %v579 = vld [vmem:[#allocation4 + $0x38] sm:$0xff]
    %v580 = vld [vmem:[#allocation4 + $0x40] sm:$0xff]
    %v581 = vld [vmem:[#allocation4 + $0x48] sm:$0xff]
    %v582 = vld [vmem:[#allocation4 + $0x50] sm:$0xff]
    %v583 = vld [vmem:[#allocation4 + $0x58] sm:$0xff]
    %v584 = vld [vmem:[#allocation4 + $0x60] sm:$0xff]
    %v585 = vld [vmem:[#allocation4 + $0x68] sm:$0xff]
    %v586 = vld [vmem:[#allocation4 + $0x70] sm:$0xff]
    %v587 = vld [vmem:[#allocation4 + $0x78] sm:$0xff]
    %v588 = vld [vmem:[#allocation4 + $0x80] sm:$0xff]
    %v589 = vld [vmem:[#allocation4 + $0x88] sm:$0xff]
    %v590 = vld [vmem:[#allocation4 + $0x90] sm:$0xff]
    %v591 = vld [vmem:[#allocation4 + $0x98] sm:$0xff]
    %v592 = vld [vmem:[#allocation4 + $0xa0] sm:$0xff]
    %v593 = vld [vmem:[#allocation4 + $0xa8] sm:$0xff]
    %v594 = vld [vmem:[#allocation4 + $0xb0] sm:$0xff]
    %v595 = vld [vmem:[#allocation4 + $0xb8] sm:$0xff]
    %v596 = vld [vmem:[#allocation4 + $0xc0] sm:$0xff]
    %v597 = vld [vmem:[#allocation4 + $0xc8] sm:$0xff]
    %v598 = vld [vmem:[#allocation4 + $0xd0] sm:$0xff]
    %v599 = vld [vmem:[#allocation4 + $0xd8] sm:$0xff]
    %v600 = vld [vmem:[#allocation4 + $0xe0] sm:$0xff]
    %v601 = vld [vmem:[#allocation4 + $0xe8] sm:$0xff]
    %v602 = vld [vmem:[#allocation4 + $0xf0] sm:$0xff]
    %v603 = vld [vmem:[#allocation4 + $0xf8] sm:$0xff]
    %v604 = vld [vmem:[#allocation4 + $0x100] sm:$0xff]
    %v605 = vld [vmem:[#allocation4 + $0x108] sm:$0xff]
    %v606 = vld [vmem:[#allocation4 + $0x110] sm:$0xff]
    %v607 = vld [vmem:[#allocation4 + $0x118] sm:$0xff]
    %v608 = vld [vmem:[#allocation4 + $0x120] sm:$0xff]
    %v609 = vld [vmem:[#allocation4 + $0x128] sm:$0xff]
    %v610 = vld [vmem:[#allocation4 + $0x130] sm:$0xff]
    %v611 = vld [vmem:[#allocation4 + $0x138] sm:$0xff]
    %v612 = vld [vmem:[#allocation4 + $0x140] sm:$0xff]
    %v613 = vld [vmem:[#allocation4 + $0x148] sm:$0xff]
    %v614 = vld [vmem:[#allocation4 + $0x150] sm:$0xff]
    %v615 = vld [vmem:[#allocation4 + $0x158] sm:$0xff]
    %v616 = vld [vmem:[#allocation4 + $0x160] sm:$0xff]
    %v617 = vld [vmem:[#allocation4 + $0x168] sm:$0xff]
    %v618 = vld [vmem:[#allocation4 + $0x170] sm:$0xff]
    %v619 = vld [vmem:[#allocation4 + $0x178] sm:$0xff]
    %v620 = vld [vmem:[#allocation4 + $0x180] sm:$0xff]
    %v621 = vld [vmem:[#allocation4 + $0x188] sm:$0xff]
    %v622 = vld [vmem:[#allocation4 + $0x190] sm:$0xff]
    %v623 = vld [vmem:[#allocation4 + $0x198] sm:$0xff]
    %v624 = vld [vmem:[#allocation4 + $0x1a0] sm:$0xff]
    %v625 = vld [vmem:[#allocation4 + $0x1a8] sm:$0xff]
    %v626 = vld [vmem:[#allocation4 + $0x1b0] sm:$0xff]
    %v627 = vld [vmem:[#allocation4 + $0x1b8] sm:$0xff]
    %v628 = vld [vmem:[#allocation4 + $0x1c0] sm:$0xff]
    %v629 = vld [vmem:[#allocation4 + $0x1c8] sm:$0xff]
    %v630 = vld [vmem:[#allocation4 + $0x1d0] sm:$0xff]
    %v631 = vld [vmem:[#allocation4 + $0x1d8] sm:$0xff]
    %v632 = vld [vmem:[#allocation4 + $0x1e0] sm:$0xff]
    %v633 = vld [vmem:[#allocation4 + $0x1e8] sm:$0xff]
    %v634 = vld [vmem:[#allocation4 + $0x1f0] sm:$0xff]
    %v635 = vld [vmem:[#allocation4 + $0x1f8] sm:$0xff]
    %v636 = vld [vmem:[%s4] sm:$0x3]
    %v638 = vlaneseq
    %v639 = vshrl.u32 %v638, 7
    %v640 = vsub.s32 0, %v639
    %v641 = vrot.slane %v636, %v640
    %v642 = vlaneseq
    %v643 = vshrl.u32 %v642, 7
    %v644 = vsub.s32 1, %v643
    %v645 = vrot.slane %v636, %v644
    %v712 = vunpack.c.l.b16 %v572
    %v713 = vunpack.c.h.b16 %v572
    %v714 = vunpack.c.l.b16 %v573
    %v715 = vunpack.c.h.b16 %v573
    %v716 = vunpack.c.l.b16 %v574
    %v717 = vunpack.c.h.b16 %v574
    %v718 = vunpack.c.l.b16 %v575
    %v719 = vunpack.c.h.b16 %v575
    %v720 = vunpack.c.l.b16 %v576
    %v721 = vunpack.c.h.b16 %v576
    %v722 = vunpack.c.l.b16 %v577
    %v723 = vunpack.c.h.b16 %v577
    %v724 = vunpack.c.l.b16 %v578
    %v725 = vunpack.c.h.b16 %v578
    %v726 = vunpack.c.l.b16 %v579
    %v727 = vunpack.c.h.b16 %v579
    %v728 = vunpack.c.l.b16 %v580
    %v729 = vunpack.c.h.b16 %v580
    %v730 = vunpack.c.l.b16 %v581
    %v731 = vunpack.c.h.b16 %v581
    %v732 = vunpack.c.l.b16 %v582
    %v733 = vunpack.c.h.b16 %v582
    %v734 = vunpack.c.l.b16 %v583
    %v735 = vunpack.c.h.b16 %v583
    %v736 = vunpack.c.l.b16 %v584
    %v737 = vunpack.c.h.b16 %v584
    %v738 = vunpack.c.l.b16 %v585
    %v739 = vunpack.c.h.b16 %v585
    %v740 = vunpack.c.l.b16 %v586
    %v741 = vunpack.c.h.b16 %v586
    %v742 = vunpack.c.l.b16 %v587
    %v743 = vunpack.c.h.b16 %v587
    %v744 = vunpack.c.l.b16 %v588
    %v745 = vunpack.c.h.b16 %v588
    %v746 = vunpack.c.l.b16 %v589
    %v747 = vunpack.c.h.b16 %v589
    %v748 = vunpack.c.l.b16 %v590
    %v749 = vunpack.c.h.b16 %v590
    %v750 = vunpack.c.l.b16 %v591
    %v751 = vunpack.c.h.b16 %v591
    %v752 = vunpack.c.l.b16 %v592
    %v753 = vunpack.c.h.b16 %v592
    %v754 = vunpack.c.l.b16 %v593
    %v755 = vunpack.c.h.b16 %v593
    %v756 = vunpack.c.l.b16 %v594
    %v757 = vunpack.c.h.b16 %v594
    %v758 = vunpack.c.l.b16 %v595
    %v759 = vunpack.c.h.b16 %v595
    %v760 = vunpack.c.l.b16 %v596
    %v761 = vunpack.c.h.b16 %v596
    %v762 = vunpack.c.l.b16 %v597
    %v763 = vunpack.c.h.b16 %v597
    %v764 = vunpack.c.l.b16 %v598
    %v765 = vunpack.c.h.b16 %v598
    %v766 = vunpack.c.l.b16 %v599
    %v767 = vunpack.c.h.b16 %v599
    %v768 = vunpack.c.l.b16 %v600
    %v769 = vunpack.c.h.b16 %v600
    %v770 = vunpack.c.l.b16 %v601
    %v771 = vunpack.c.h.b16 %v601
    %v772 = vunpack.c.l.b16 %v602
    %v773 = vunpack.c.h.b16 %v602
    %v774 = vunpack.c.l.b16 %v603
    %v775 = vunpack.c.h.b16 %v603
    %v776 = vunpack.c.l.b16 %v604
    %v777 = vunpack.c.h.b16 %v604
    %v778 = vunpack.c.l.b16 %v605
    %v779 = vunpack.c.h.b16 %v605
    %v780 = vunpack.c.l.b16 %v606
    %v781 = vunpack.c.h.b16 %v606
    %v782 = vunpack.c.l.b16 %v607
    %v783 = vunpack.c.h.b16 %v607
    %v784 = vunpack.c.l.b16 %v608
    %v785 = vunpack.c.h.b16 %v608
    %v786 = vunpack.c.l.b16 %v609
    %v787 = vunpack.c.h.b16 %v609
    %v788 = vunpack.c.l.b16 %v610
    %v789 = vunpack.c.h.b16 %v610
    %v790 = vunpack.c.l.b16 %v611
    %v791 = vunpack.c.h.b16 %v611
    %v792 = vunpack.c.l.b16 %v612
    %v793 = vunpack.c.h.b16 %v612
    %v794 = vunpack.c.l.b16 %v613
    %v795 = vunpack.c.h.b16 %v613
    %v796 = vunpack.c.l.b16 %v614
    %v797 = vunpack.c.h.b16 %v614
    %v798 = vunpack.c.l.b16 %v615
    %v799 = vunpack.c.h.b16 %v615
    %v800 = vunpack.c.l.b16 %v616
    %v801 = vunpack.c.h.b16 %v616
    %v802 = vunpack.c.l.b16 %v617
    %v803 = vunpack.c.h.b16 %v617
    %v804 = vunpack.c.l.b16 %v618
    %v805 = vunpack.c.h.b16 %v618
    %v806 = vunpack.c.l.b16 %v619
    %v807 = vunpack.c.h.b16 %v619
    %v808 = vunpack.c.l.b16 %v620
    %v809 = vunpack.c.h.b16 %v620
    %v810 = vunpack.c.l.b16 %v621
    %v811 = vunpack.c.h.b16 %v621
    %v812 = vunpack.c.l.b16 %v622
    %v813 = vunpack.c.h.b16 %v622
    %v814 = vunpack.c.l.b16 %v623
    %v815 = vunpack.c.h.b16 %v623
    %v816 = vunpack.c.l.b16 %v624
    %v817 = vunpack.c.h.b16 %v624
    %v818 = vunpack.c.l.b16 %v625
    %v819 = vunpack.c.h.b16 %v625
    %v820 = vunpack.c.l.b16 %v626
    %v821 = vunpack.c.h.b16 %v626
    %v822 = vunpack.c.l.b16 %v627
    %v823 = vunpack.c.h.b16 %v627
    %v824 = vunpack.c.l.b16 %v628
    %v825 = vunpack.c.h.b16 %v628
    %v826 = vunpack.c.l.b16 %v629
    %v827 = vunpack.c.h.b16 %v629
    %v828 = vunpack.c.l.b16 %v630
    %v829 = vunpack.c.h.b16 %v630
    %v830 = vunpack.c.l.b16 %v631
    %v831 = vunpack.c.h.b16 %v631
    %v832 = vunpack.c.l.b16 %v632
    %v833 = vunpack.c.h.b16 %v632
    %v834 = vunpack.c.l.b16 %v633
    %v835 = vunpack.c.h.b16 %v633
    %v836 = vunpack.c.l.b16 %v634
    %v837 = vunpack.c.h.b16 %v634
    %v838 = vunpack.c.l.b16 %v635
    %v839 = vunpack.c.h.b16 %v635
    %v840 = vpack.c.b16 %v714, %v712
    %v841 = vpack.c.b16 %v715, %v713
    %v842 = vpack.c.b16 %v718, %v716
    %v843 = vpack.c.b16 %v719, %v717
    %v844 = vpack.c.b16 %v722, %v720
    %v845 = vpack.c.b16 %v723, %v721
    %v846 = vpack.c.b16 %v726, %v724
    %v847 = vpack.c.b16 %v727, %v725
    %v848 = vpack.c.b16 %v730, %v728
    %v849 = vpack.c.b16 %v731, %v729
    %v850 = vpack.c.b16 %v734, %v732
    %v851 = vpack.c.b16 %v735, %v733
    %v852 = vpack.c.b16 %v738, %v736
    %v853 = vpack.c.b16 %v739, %v737
    %v854 = vpack.c.b16 %v742, %v740
    %v855 = vpack.c.b16 %v743, %v741
    %v856 = vpack.c.b16 %v746, %v744
    %v857 = vpack.c.b16 %v747, %v745
    %v858 = vpack.c.b16 %v750, %v748
    %v859 = vpack.c.b16 %v751, %v749
    %v860 = vpack.c.b16 %v754, %v752
    %v861 = vpack.c.b16 %v755, %v753
    %v862 = vpack.c.b16 %v758, %v756
    %v863 = vpack.c.b16 %v759, %v757
    %v864 = vpack.c.b16 %v762, %v760
    %v865 = vpack.c.b16 %v763, %v761
    %v866 = vpack.c.b16 %v766, %v764
    %v867 = vpack.c.b16 %v767, %v765
    %v868 = vpack.c.b16 %v770, %v768
    %v869 = vpack.c.b16 %v771, %v769
    %v870 = vpack.c.b16 %v774, %v772
    %v871 = vpack.c.b16 %v775, %v773
    %v872 = vpack.c.b16 %v778, %v776
    %v873 = vpack.c.b16 %v779, %v777
    %v874 = vpack.c.b16 %v782, %v780
    %v875 = vpack.c.b16 %v783, %v781
    %v876 = vpack.c.b16 %v786, %v784
    %v877 = vpack.c.b16 %v787, %v785
    %v878 = vpack.c.b16 %v790, %v788
    %v879 = vpack.c.b16 %v791, %v789
    %v880 = vpack.c.b16 %v794, %v792
    %v881 = vpack.c.b16 %v795, %v793
    %v882 = vpack.c.b16 %v798, %v796
    %v883 = vpack.c.b16 %v799, %v797
    %v884 = vpack.c.b16 %v802, %v800
    %v885 = vpack.c.b16 %v803, %v801
    %v886 = vpack.c.b16 %v806, %v804
    %v887 = vpack.c.b16 %v807, %v805
    %v888 = vpack.c.b16 %v810, %v808
    %v889 = vpack.c.b16 %v811, %v809
    %v890 = vpack.c.b16 %v814, %v812
    %v891 = vpack.c.b16 %v815, %v813
    %v892 = vpack.c.b16 %v818, %v816
    %v893 = vpack.c.b16 %v819, %v817
    %v894 = vpack.c.b16 %v822, %v820
    %v895 = vpack.c.b16 %v823, %v821
    %v896 = vpack.c.b16 %v826, %v824
    %v897 = vpack.c.b16 %v827, %v825
    %v898 = vpack.c.b16 %v830, %v828
    %v899 = vpack.c.b16 %v831, %v829
    %v900 = vpack.c.b16 %v834, %v832
    %v901 = vpack.c.b16 %v835, %v833
    %v902 = vpack.c.b16 %v838, %v836
    %v903 = vpack.c.b16 %v839, %v837
    %968 = vmatprep.subr.bf16.mxu0 %v855
    %969 = vmatpush1.bf16.msra.mxu0 %v854
    %970 = vmatprep.subr.bf16.mxu0 %v853
    %971 = vmatpush1.bf16.msra.mxu0 %v852
    %972 = vmatprep.subr.bf16.mxu0 %v851
    %973 = vmatpush1.bf16.msra.mxu0 %v850
    %974 = vmatprep.subr.bf16.mxu0 %v849
    %975 = vmatpush1.bf16.msra.mxu0 %v848
    %976 = vmatprep.subr.bf16.mxu0 %v847
    %977 = vmatpush1.bf16.msra.mxu0 %v846
    %978 = vmatprep.subr.bf16.mxu0 %v845
    %979 = vmatpush1.bf16.msra.mxu0 %v844
    %980 = vmatprep.subr.bf16.mxu0 %v843
    %981 = vmatpush1.bf16.msra.mxu0 %v842
    %982 = vmatprep.subr.bf16.mxu0 %v841
    %983 = vmatpush1.bf16.msra.mxu0 %v840
    %984 = vmatprep.subr.bf16.mxu0 %v871
    %985 = vmatpush2.bf16.msra.mxu0 %v870
    %986 = vmatprep.subr.bf16.mxu0 %v869
    %987 = vmatpush2.bf16.msra.mxu0 %v868
    %988 = vmatprep.subr.bf16.mxu0 %v867
    %989 = vmatpush2.bf16.msra.mxu0 %v866
    %990 = vmatprep.subr.bf16.mxu0 %v865
    %991 = vmatpush2.bf16.msra.mxu0 %v864
    %992 = vmatprep.subr.bf16.mxu0 %v863
    %993 = vmatpush2.bf16.msra.mxu0 %v862
    %994 = vmatprep.subr.bf16.mxu0 %v861
    %995 = vmatpush2.bf16.msra.mxu0 %v860
    %996 = vmatprep.subr.bf16.mxu0 %v859
    %997 = vmatpush2.bf16.msra.mxu0 %v858
    %998 = vmatprep.subr.bf16.mxu0 %v857
    %999 = vmatpush2.bf16.msra.mxu0 %v856
    %1000 = vmatprep.mubr.bf16.mxu0 %v569
    %1001 = vmatmul.mubr.bf16.gmra.mxu0 %v568
    %v1002 = vpop.f32.mrf.mxu0
    %v1003 = vadd.f32 %v641, %v1002
    %v1004 = vpop.f32.mrf.mxu0
    %v1005 = vadd.f32 %v645, %v1004
    %v1006 = vpop.f32.mrf.mxu0
    %v1007 = vpop.f32.mrf.mxu0
    %1008 = vdwg.mxu0
    %1009 = vmatprep.subr.bf16.mxu0 %v887
    %1010 = vmatpush1.bf16.msra.mxu0 %v886
    %1011 = vmatprep.subr.bf16.mxu0 %v885
    %1012 = vmatpush1.bf16.msra.mxu0 %v884
    %1013 = vmatprep.subr.bf16.mxu0 %v883
    %1014 = vmatpush1.bf16.msra.mxu0 %v882
    %1015 = vmatprep.subr.bf16.mxu0 %v881
    %1016 = vmatpush1.bf16.msra.mxu0 %v880
    %1017 = vmatprep.subr.bf16.mxu0 %v879
    %1018 = vmatpush1.bf16.msra.mxu0 %v878
    %1019 = vmatprep.subr.bf16.mxu0 %v877
    %1020 = vmatpush1.bf16.msra.mxu0 %v876
    %1021 = vmatprep.subr.bf16.mxu0 %v875
    %1022 = vmatpush1.bf16.msra.mxu0 %v874
    %1023 = vmatprep.subr.bf16.mxu0 %v873
    %1024 = vmatpush1.bf16.msra.mxu0 %v872
    %1025 = vmatprep.subr.bf16.mxu0 %v903
    %1026 = vmatpush2.bf16.msra.mxu0 %v902
    %1027 = vmatprep.subr.bf16.mxu0 %v901
    %1028 = vmatpush2.bf16.msra.mxu0 %v900
    %1029 = vmatprep.subr.bf16.mxu0 %v899
    %1030 = vmatpush2.bf16.msra.mxu0 %v898
    %1031 = vmatprep.subr.bf16.mxu0 %v897
    %1032 = vmatpush2.bf16.msra.mxu0 %v896
    %1033 = vmatprep.subr.bf16.mxu0 %v895
    %1034 = vmatpush2.bf16.msra.mxu0 %v894
    %1035 = vmatprep.subr.bf16.mxu0 %v893
    %1036 = vmatpush2.bf16.msra.mxu0 %v892
    %1037 = vmatprep.subr.bf16.mxu0 %v891
    %1038 = vmatpush2.bf16.msra.mxu0 %v890
    %1039 = vmatprep.subr.bf16.mxu0 %v889
    %1040 = vmatpush2.bf16.msra.mxu0 %v888
    %1041 = vmatprep.mubr.bf16.mxu0 %v571
    %1042 = vmatmul.mubr.bf16.gmra.mxu0 %v570
    %v1043 = vpop.f32.mrf.mxu0
    %v1044 = vadd.f32 %v1003, %v1043
    %v1045 = vpop.f32.mrf.mxu0
    %v1046 = vadd.f32 %v1005, %v1045
    %v1047 = vpop.f32.mrf.mxu0
    %v1048 = vpop.f32.mrf.mxu0
    %1049 = vdwg.mxu0
    %v1050 = vmax.f32 %v1044, 0.0
    %v1051 = vmax.f32 %v1046, 0.0
    %v1052 = vpack.c.bf16 %v1050, %v1050
    %v1053 = vpack.c.bf16 %v1051, %v1051
    %v1054 = vld [vmem:[#allocation6] sm:$0xf]
    %v1055 = vld [vmem:[#allocation6 + $0x4] sm:$0xf]
    %v1056 = vld [vmem:[#allocation6 + $0x8] sm:$0xf]
    %v1057 = vld [vmem:[#allocation6 + $0xc] sm:$0xf]
    %v1058 = vld [vmem:[#allocation6 + $0x10] sm:$0xf]
    %v1059 = vld [vmem:[#allocation6 + $0x14] sm:$0xf]
    %v1060 = vld [vmem:[#allocation6 + $0x18] sm:$0xf]
    %v1061 = vld [vmem:[#allocation6 + $0x1c] sm:$0xf]
    %v1062 = vld [vmem:[#allocation6 + $0x20] sm:$0xf]
    %v1063 = vld [vmem:[#allocation6 + $0x24] sm:$0xf]
    %v1064 = vld [vmem:[#allocation6 + $0x28] sm:$0xf]
    %v1065 = vld [vmem:[#allocation6 + $0x2c] sm:$0xf]
    %v1066 = vld [vmem:[#allocation6 + $0x30] sm:$0xf]
    %v1067 = vld [vmem:[#allocation6 + $0x34] sm:$0xf]
    %v1068 = vld [vmem:[#allocation6 + $0x38] sm:$0xf]
    %v1069 = vld [vmem:[#allocation6 + $0x3c] sm:$0xf]
    %v1070 = vld [vmem:[#allocation6 + $0x40] sm:$0xf]
    %v1071 = vld [vmem:[#allocation6 + $0x44] sm:$0xf]
    %v1072 = vld [vmem:[#allocation6 + $0x48] sm:$0xf]
    %v1073 = vld [vmem:[#allocation6 + $0x4c] sm:$0xf]
    %v1074 = vld [vmem:[#allocation6 + $0x50] sm:$0xf]
    %v1075 = vld [vmem:[#allocation6 + $0x54] sm:$0xf]
    %v1076 = vld [vmem:[#allocation6 + $0x58] sm:$0xf]
    %v1077 = vld [vmem:[#allocation6 + $0x5c] sm:$0xf]
    %v1078 = vld [vmem:[#allocation6 + $0x60] sm:$0xf]
    %v1079 = vld [vmem:[#allocation6 + $0x64] sm:$0xf]
    %v1080 = vld [vmem:[#allocation6 + $0x68] sm:$0xf]
    %v1081 = vld [vmem:[#allocation6 + $0x6c] sm:$0xf]
    %v1082 = vld [vmem:[#allocation6 + $0x70] sm:$0xf]
    %v1083 = vld [vmem:[#allocation6 + $0x74] sm:$0xf]
    %v1084 = vld [vmem:[#allocation6 + $0x78] sm:$0xf]
    %v1085 = vld [vmem:[#allocation6 + $0x7c] sm:$0xf]
    %v1086 = vld [vmem:[%s6] sm:$0x1]
    %v1088 = vlaneseq
    %v1089 = vshrl.u32 %v1088, 7
    %v1090 = vsub.s32 0, %v1089
    %v1091 = vrot.slane %v1086, %v1090
    %v1125 = vunpack.c.l.b16 %v1054
    %v1126 = vunpack.c.l.b16 %v1055
    %v1127 = vunpack.c.l.b16 %v1056
    %v1128 = vunpack.c.l.b16 %v1057
    %v1129 = vunpack.c.l.b16 %v1058
    %v1130 = vunpack.c.l.b16 %v1059
    %v1131 = vunpack.c.l.b16 %v1060
    %v1132 = vunpack.c.l.b16 %v1061
    %v1133 = vunpack.c.l.b16 %v1062
    %v1134 = vunpack.c.l.b16 %v1063
    %v1135 = vunpack.c.l.b16 %v1064
    %v1136 = vunpack.c.l.b16 %v1065
    %v1137 = vunpack.c.l.b16 %v1066
    %v1138 = vunpack.c.l.b16 %v1067
    %v1139 = vunpack.c.l.b16 %v1068
    %v1140 = vunpack.c.l.b16 %v1069
    %v1141 = vunpack.c.l.b16 %v1070
    %v1142 = vunpack.c.l.b16 %v1071
    %v1143 = vunpack.c.l.b16 %v1072
    %v1144 = vunpack.c.l.b16 %v1073
    %v1145 = vunpack.c.l.b16 %v1074
    %v1146 = vunpack.c.l.b16 %v1075
    %v1147 = vunpack.c.l.b16 %v1076
    %v1148 = vunpack.c.l.b16 %v1077
    %v1149 = vunpack.c.l.b16 %v1078
    %v1150 = vunpack.c.l.b16 %v1079
    %v1151 = vunpack.c.l.b16 %v1080
    %v1152 = vunpack.c.l.b16 %v1081
    %v1153 = vunpack.c.l.b16 %v1082
    %v1154 = vunpack.c.l.b16 %v1083
    %v1155 = vunpack.c.l.b16 %v1084
    %v1156 = vunpack.c.l.b16 %v1085
    %v1157 = vpack.c.b16 %v1126, %v1125
    %v1158 = vpack.c.b16 %v1128, %v1127
    %v1159 = vpack.c.b16 %v1130, %v1129
    %v1160 = vpack.c.b16 %v1132, %v1131
    %v1161 = vpack.c.b16 %v1134, %v1133
    %v1162 = vpack.c.b16 %v1136, %v1135
    %v1163 = vpack.c.b16 %v1138, %v1137
    %v1164 = vpack.c.b16 %v1140, %v1139
    %v1165 = vpack.c.b16 %v1142, %v1141
    %v1166 = vpack.c.b16 %v1144, %v1143
    %v1167 = vpack.c.b16 %v1146, %v1145
    %v1168 = vpack.c.b16 %v1148, %v1147
    %v1169 = vpack.c.b16 %v1150, %v1149
    %v1170 = vpack.c.b16 %v1152, %v1151
    %v1171 = vpack.c.b16 %v1154, %v1153
    %v1172 = vpack.c.b16 %v1156, %v1155
    %1189 = vmatprep.subr.bf16.mxu0 0
    %1190 = vmatpush1.bf16.msra.mxu0 %v1164
    %1191 = vmatprep.subr.bf16.mxu0 0
    %1192 = vmatpush1.bf16.msra.mxu0 %v1163
    %1193 = vmatprep.subr.bf16.mxu0 0
    %1194 = vmatpush1.bf16.msra.mxu0 %v1162
    %1195 = vmatprep.subr.bf16.mxu0 0
    %1196 = vmatpush1.bf16.msra.mxu0 %v1161
    %1197 = vmatprep.subr.bf16.mxu0 0
    %1198 = vmatpush1.bf16.msra.mxu0 %v1160
    %1199 = vmatprep.subr.bf16.mxu0 0
    %1200 = vmatpush1.bf16.msra.mxu0 %v1159
    %1201 = vmatprep.subr.bf16.mxu0 0
    %1202 = vmatpush1.bf16.msra.mxu0 %v1158
    %1203 = vmatprep.subr.bf16.mxu0 0
    %1204 = vmatpush1.bf16.msra.mxu0 %v1157
    %1205 = vmatprep.subr.bf16.mxu0 0
    %1206 = vmatpush2.bf16.msra.mxu0 %v1172
    %1207 = vmatprep.subr.bf16.mxu0 0
    %1208 = vmatpush2.bf16.msra.mxu0 %v1171
    %1209 = vmatprep.subr.bf16.mxu0 0
    %1210 = vmatpush2.bf16.msra.mxu0 %v1170
    %1211 = vmatprep.subr.bf16.mxu0 0
    %1212 = vmatpush2.bf16.msra.mxu0 %v1169
    %1213 = vmatprep.subr.bf16.mxu0 0
    %1214 = vmatpush2.bf16.msra.mxu0 %v1168
    %1215 = vmatprep.subr.bf16.mxu0 0
    %1216 = vmatpush2.bf16.msra.mxu0 %v1167
    %1217 = vmatprep.subr.bf16.mxu0 0
    %1218 = vmatpush2.bf16.msra.mxu0 %v1166
    %1219 = vmatprep.subr.bf16.mxu0 0
    %1220 = vmatpush2.bf16.msra.mxu0 %v1165
    %1221 = vmatprep.mubr.bf16.mxu0 %v1053
    %1222 = vmatmul.mubr.bf16.gmra.mxu0 %v1052
    %v1223 = vpop.f32.mrf.mxu0
    %v1224 = vadd.f32 %v1091, %v1223
    %v1225 = vpop.f32.mrf.mxu0
    %v1226 = vpop.f32.mrf.mxu0
    %v1227 = vpop.f32.mrf.mxu0
    %1228 = vdwg.mxu0
    %v1229 = vtanh.pop %v1224
    %v1230 = vpack.c.bf16 %v1229, %v1229
    %vm1231 = vcmask 1042432
    %vm1232 = vsmask.f32 2304
    %vm1233 = vmand %vm1231, %vm1232
    %v1234 = vld [vmem:[%s7] sm:$0x7]
    %v1235 = vsel %vm1233, %v1230, %v1234
    %1236 = vst [vmem:[%s7] sm:$0x7] %v1235
    // Predicated region
    $region42: #{encoder_forward.1} parent=1 // pred_check
      _
    $region43: #{encoder_forward.1} parent=1 // pred_check_branch
      %1238 = sbr.rel (0) target = $region45
    $region44: #{encoder_forward.1} parent=1 // pred_region
      _
    $region45: #{encoder_forward.1} parent=1 // pred_fallthru
      _
    // Predicated region
    $region46: #{encoder_forward.1} parent=1 // pred_check
      _
    $region47: #{encoder_forward.1} parent=1 // pred_check_branch
      %1240 = sbr.rel (0) target = $region49
    $region48: #{encoder_forward.1} parent=1 // pred_region
      _
    $region49: #{encoder_forward.1} parent=1 // pred_fallthru
      _
    %1241 = vsyncpa [#allocation3], 1
    %1242 = vsyncpa [#allocation5], 1

</llo_original>
